<compile_context>
chip_gen: v6e
topology: v6e:2x2x1
jax: 0.10.0
libtpu: 0.0.40
codegen_flags: <defaults>
</compile_context>

<pallas_src>
import jax
import jax.numpy as jnp
from jax.experimental import pallas as pl
from jax.experimental.pallas import tpu as pltpu

# ----- model hyper-parameters (PyTorch __init__ defaults) -----
ANSWERS_COUNT = 8                          # answers_count
ATTR_BRANCHES = 10                         # attr_branches
TOTAL_RULES = 4                            # total_rules
R = TOTAL_RULES + 1                        # softmax-group size (dim=2 of the 4D view)
G = ANSWERS_COUNT * ATTR_BRANCHES          # 80  (answers*branches, lane group)
GP = ((G + 127) // 128) * 128              # 128 (lane-aligned group width)
F = ANSWERS_COUNT * ATTR_BRANCHES * R      # 400 (original flattened feature size)
A_OUT = ANSWERS_COUNT                      # to_logit output size
A_PAD = 128                                # lane-dense padded output width

B = 8        # batch (small test shape)
D_IN = 32    # input feature size of the stand-in rules_classifier


def _round_up(x, m):
    return ((x + m - 1) // m) * m


def _sascl_kernel(sets_ref, rcw_ref, rcb_ref, wt_ref, b_ref, o_ref):
    """sets: (TB, D_IN); rcw: (D_IN, R*GP); rcb: (1, R*GP); wt: (R*GP, A_PAD); b: (1, A_PAD)."""
    # (1) fused frozen rules_classifier: one MXU push, contraction depth D_IN.
    z = jnp.dot(sets_ref[...], rcw_ref[...], preferred_element_type=jnp.float32)
    z = z + rcb_ref[...]                                     # (TB, R*GP)

    # (2) softmax over the rules axis: R lane-aligned chunks of width GP.
    #     Pure VPU/EUP — no cross-lane/sublane XLU reductions.
    chunks = [z[:, r * GP:(r + 1) * GP] for r in range(R)]   # each (TB, GP), aligned views
    m = chunks[0]
    for c in chunks[1:]:
        m = jnp.maximum(m, c)                                # elementwise VPU max
    es = [jnp.exp(c - m) for c in chunks]                    # EUP exps
    s = es[0]
    for e in es[1:]:
        s = s + e
    inv = pl.reciprocal(s, approx=False)                     # exact: free at this size
    probs = jnp.concatenate([e * inv for e in es], axis=1)   # (TB, R*GP), aligned concat

    # (3) single depth-(R*GP) contraction against pre-transposed (K, N) weight.
    logits = jnp.dot(probs, wt_ref[...],
                     preferred_element_type=jnp.float32)     # (TB, A_PAD)
    o_ref[...] = (logits + b_ref[...]).astype(o_ref.dtype)   # unmasked lane-dense store


def sascl_mlp_score_pallas(sets, rcw_p, rcb_p, wt_p, bias_p):
    """Batch-gridded fused forward. Returns (B, A_OUT) logits."""
    b = sets.shape[0]
    # Batch tile: full-MXU 128-row tiles for big batches, minimal 8-row tile otherwise.
    tb = 128 if b >= 128 else _round_up(b, 8)
    b_pad = _round_up(b, tb)
    if b_pad != b:
        sets = jnp.pad(sets, ((0, b_pad - b), (0, 0)))
    grid = (b_pad // tb,)

    rgp = R * GP
    # Advisory cost hint so XLA treats this as the tiny op it is.
    flops = 2 * b_pad * D_IN * rgp + 2 * b_pad * rgp * A_PAD + 8 * b_pad * rgp
    transcendentals = b_pad * rgp + b_pad * GP               # exps + reciprocal
    bytes_accessed = 4 * (b_pad * D_IN + D_IN * rgp + rgp
                          + rgp * A_PAD + A_PAD + b_pad * A_PAD)

    out = pl.pallas_call(
        _sascl_kernel,
        out_shape=jax.ShapeDtypeStruct((b_pad, A_PAD), jnp.float32),
        grid=grid,
        in_specs=[
            pl.BlockSpec((tb, D_IN), lambda i: (i, 0)),       # sets: tiled over batch
            pl.BlockSpec((D_IN, rgp), lambda i: (0, 0)),      # rcw: resident
            pl.BlockSpec((1, rgp), lambda i: (0, 0)),         # rcb: resident
            pl.BlockSpec((rgp, A_PAD), lambda i: (0, 0)),     # wt:  resident, (K, N)
            pl.BlockSpec((1, A_PAD), lambda i: (0, 0)),       # bias: resident
        ],
        out_specs=pl.BlockSpec((tb, A_PAD), lambda i: (i, 0)),
        compiler_params=pltpu.CompilerParams(
            dimension_semantics=("parallel",)),               # megacore-shardable on v7x
        cost_estimate=pl.CostEstimate(
            flops=int(flops),
            transcendentals=int(transcendentals),
            bytes_accessed=int(bytes_accessed)),
    )(sets, rcw_p, rcb_p, wt_p, bias_p)
    return out[:b, :A_OUT]


def prepare_params(rc_w, rc_b, lin_w, lin_b):
    """One-time re-layout of the FROZEN weights (hoisted out of the per-call forward).

    Feature order inside the kernel is f' = r*GP + (a*Br + br), with each rules-chunk
    padded from G=80 to GP=128 lanes; the to_logit weight is additionally transposed
    to (K, N) = (R*GP, A_PAD) and zero-padded to A_PAD=128 output lanes.
    Pad rows/columns are exactly zero so they never affect the logits.
    """
    pad_g = GP - G
    pad_a = A_PAD - A_OUT

    rcw = rc_w.reshape(D_IN, ANSWERS_COUNT, R, ATTR_BRANCHES)
    rcw = jnp.transpose(rcw, (0, 2, 1, 3)).reshape(D_IN, R, G)
    rcw = jnp.pad(rcw, ((0, 0), (0, 0), (0, pad_g))).reshape(D_IN, R * GP)

    rcb = rc_b.reshape(ANSWERS_COUNT, R, ATTR_BRANCHES)
    rcb = jnp.transpose(rcb, (1, 0, 2)).reshape(R, G)
    rcb = jnp.pad(rcb, ((0, 0), (0, pad_g))).reshape(1, R * GP)

    wt = lin_w.reshape(A_OUT, ANSWERS_COUNT, R, ATTR_BRANCHES)
    wt = jnp.transpose(wt, (0, 2, 1, 3)).reshape(A_OUT, R, G)
    wt = jnp.pad(wt, ((0, 0), (0, 0), (0, pad_g))).reshape(A_OUT, R * GP)
    wt = jnp.transpose(wt, (1, 0))                           # (R*GP, A_OUT): MXU (K, N)
    wt = jnp.pad(wt, ((0, 0), (0, pad_a)))                   # (R*GP, A_PAD) lane-dense out

    bias = jnp.pad(lin_b.reshape(1, A_OUT), ((0, 0), (0, pad_a)))   # (1, A_PAD)

    # Guard the zero-pad invariant the kernel's correctness relies on.
    assert float(jnp.max(jnp.abs(rcw.reshape(D_IN, R, GP)[:, :, G:]))) == 0.0
    assert float(jnp.max(jnp.abs(rcb.reshape(R, GP)[:, G:]))) == 0.0
    assert float(jnp.max(jnp.abs(wt.reshape(R, GP, A_PAD)[:, G:, :]))) == 0.0
    assert float(jnp.max(jnp.abs(wt[:, A_OUT:]))) == 0.0
    assert float(jnp.max(jnp.abs(bias[:, A_OUT:]))) == 0.0
    return rcw, rcb, wt, bias


@jax.jit
def sascl_forward(sets, rcw_p, rcb_p, wt_p, bias_p):
    """Full module forward with pre-permuted params (permutations done once, not per call)."""
    # TODO(synk): rules_classifier is an arbitrary frozen external module in the
    # original code; here it is a deterministic stand-in Linear fused into the kernel.
    return sascl_mlp_score_pallas(sets, rcw_p, rcb_p, wt_p, bias_p)


def sascl_forward_reference(sets, rc_w, rc_b, lin_w, lin_b):
    """Pure-JAX reference mirroring the PyTorch forward exactly (unpermuted params)."""
    rules_preds = sets @ rc_w + rc_b
    r4 = rules_preds.reshape(-1, ANSWERS_COUNT, R, ATTR_BRANCHES)
    probs = jax.nn.softmax(r4, axis=2)
    feats = probs.reshape(probs.shape[0], -1)
    return feats @ lin_w.T + lin_b


if __name__ == "__main__":
    key = jax.random.PRNGKey(0)
    k_sets, k_rcw, k_rcb, k_lw, k_lb = jax.random.split(key, 5)

    sets = jax.random.normal(k_sets, (B, D_IN), dtype=jnp.float32)
    # stand-in frozen rules_classifier parameters (Linear: D_IN -> F)
    rc_w = jax.random.normal(k_rcw, (D_IN, F), dtype=jnp.float32) * 0.05
    rc_b = jax.random.normal(k_rcb, (F,), dtype=jnp.float32) * 0.05
    # to_logit: Linear(F -> A_OUT), torch layout (out_features, in_features)
    lin_w = jax.random.normal(k_lw, (A_OUT, F), dtype=jnp.float32) * 0.05
    lin_b = jax.random.normal(k_lb, (A_OUT,), dtype=jnp.float32) * 0.05

    # One-time weight re-layout (parameter-load time), then the fused forward.
    rcw_p, rcb_p, wt_p, bias_p = prepare_params(rc_w, rc_b, lin_w, lin_b)

    out = sascl_forward(sets, rcw_p, rcb_p, wt_p, bias_p)
    out = jax.block_until_ready(out)

    ref = sascl_forward_reference(sets, rc_w, rc_b, lin_w, lin_b)
    assert out.shape == (B, A_OUT), out.shape
    # tolerance only needs to cover MXU f32 multi-pass vs XLA matmul differences
    # (softmax reciprocal is exact now)
    assert jnp.allclose(out, ref, rtol=1e-3, atol=1e-3), (
        float(jnp.max(jnp.abs(out - ref))))

    print("KERNEL_OK")
</pallas_src>

<mosaic_0001>
module attributes {stable_mosaic.version = 11 : i64} {
  func.func @_sascl_kernel(%arg0: i32, %arg1: memref<8x32xf32, #tpu.memory_space<vmem>>, %arg2: memref<32x640xf32, #tpu.memory_space<vmem>>, %arg3: memref<1x640xf32, #tpu.memory_space<vmem>>, %arg4: memref<640x128xf32, #tpu.memory_space<vmem>>, %arg5: memref<1x128xf32, #tpu.memory_space<vmem>>, %arg6: memref<8x128xf32, #tpu.memory_space<vmem>>) attributes {dimension_semantics = [#tpu.dimension_semantics<parallel>], iteration_bounds = array<i64: 1>, scalar_prefetch = 0 : i64, scratch_operands = 0 : i64, tpu.core_type = #tpu.core_type<tc>, window_params = [{transform_indices = @transform_0, window_bounds = array<i64: 8, 32>}, {pipeline_mode = #tpu.pipeline_mode<synchronous>, transform_indices = @transform_1, window_bounds = array<i64: 32, 640>}, {pipeline_mode = #tpu.pipeline_mode<synchronous>, transform_indices = @transform_2, window_bounds = array<i64: 1, 640>}, {pipeline_mode = #tpu.pipeline_mode<synchronous>, transform_indices = @transform_3, window_bounds = array<i64: 640, 128>}, {pipeline_mode = #tpu.pipeline_mode<synchronous>, transform_indices = @transform_4, window_bounds = array<i64: 1, 128>}, {transform_indices = @transform_5, window_bounds = array<i64: 8, 128>}]} {
    %c0 = arith.constant 0 : index
    %c0_0 = arith.constant 0 : index
    %0 = vector.load %arg1[%c0, %c0_0] : memref<8x32xf32, #tpu.memory_space<vmem>>, vector<8x32xf32>
    %c0_1 = arith.constant 0 : index
    %c0_2 = arith.constant 0 : index
    %1 = vector.load %arg2[%c0_1, %c0_2] : memref<32x640xf32, #tpu.memory_space<vmem>>, vector<32x640xf32>
    %cst = arith.constant dense<0.000000e+00> : vector<8x640xf32>
    %2 = tpu.matmul %0, %1, %cst {dimension_numbers = #tpu.dot_dimension_numbers<[1], [0], [0], [1], [0, 0, 1, 1], [], []>} : vector<8x32xf32>, vector<32x640xf32>, vector<8x640xf32> -> vector<8x640xf32>
    %c0_3 = arith.constant 0 : index
    %c0_4 = arith.constant 0 : index
    %3 = vector.load %arg3[%c0_3, %c0_4] : memref<1x640xf32, #tpu.memory_space<vmem>>, vector<1x640xf32>
    %4 = vector.broadcast %3 : vector<1x640xf32> to vector<8x640xf32>
    %5 = arith.addf %2, %4 : vector<8x640xf32>
    %6 = vector.extract_strided_slice %5 {offsets = [0, 0], sizes = [8, 128], strides = [1, 1]} : vector<8x640xf32> to vector<8x128xf32>
    %7 = vector.extract_strided_slice %5 {offsets = [0, 128], sizes = [8, 128], strides = [1, 1]} : vector<8x640xf32> to vector<8x128xf32>
    %8 = vector.extract_strided_slice %5 {offsets = [0, 256], sizes = [8, 128], strides = [1, 1]} : vector<8x640xf32> to vector<8x128xf32>
    %9 = vector.extract_strided_slice %5 {offsets = [0, 384], sizes = [8, 128], strides = [1, 1]} : vector<8x640xf32> to vector<8x128xf32>
    %10 = vector.extract_strided_slice %5 {offsets = [0, 512], sizes = [8, 128], strides = [1, 1]} : vector<8x640xf32> to vector<8x128xf32>
    %11 = arith.maximumf %6, %7 : vector<8x128xf32>
    %12 = arith.maximumf %11, %8 : vector<8x128xf32>
    %13 = arith.maximumf %12, %9 : vector<8x128xf32>
    %14 = arith.maximumf %13, %10 : vector<8x128xf32>
    %15 = arith.subf %6, %14 : vector<8x128xf32>
    %16 = math.exp %15 : vector<8x128xf32>
    %17 = arith.subf %7, %14 : vector<8x128xf32>
    %18 = math.exp %17 : vector<8x128xf32>
    %19 = arith.subf %8, %14 : vector<8x128xf32>
    %20 = math.exp %19 : vector<8x128xf32>
    %21 = arith.subf %9, %14 : vector<8x128xf32>
    %22 = math.exp %21 : vector<8x128xf32>
    %23 = arith.subf %10, %14 : vector<8x128xf32>
    %24 = math.exp %23 : vector<8x128xf32>
    %25 = arith.addf %16, %18 : vector<8x128xf32>
    %26 = arith.addf %25, %20 : vector<8x128xf32>
    %27 = arith.addf %26, %22 : vector<8x128xf32>
    %28 = arith.addf %27, %24 : vector<8x128xf32>
    %29 = tpu.reciprocal %28 : vector<8x128xf32> -> vector<8x128xf32>
    %30 = arith.mulf %16, %29 : vector<8x128xf32>
    %31 = arith.mulf %18, %29 : vector<8x128xf32>
    %32 = arith.mulf %20, %29 : vector<8x128xf32>
    %33 = arith.mulf %22, %29 : vector<8x128xf32>
    %34 = arith.mulf %24, %29 : vector<8x128xf32>
    %35 = tpu.concatenate %30, %31, %32, %33, %34 in 1 : vector<8x128xf32>, vector<8x128xf32>, vector<8x128xf32>, vector<8x128xf32>, vector<8x128xf32> -> vector<8x640xf32>
    %c0_5 = arith.constant 0 : index
    %c0_6 = arith.constant 0 : index
    %36 = vector.load %arg4[%c0_5, %c0_6] : memref<640x128xf32, #tpu.memory_space<vmem>>, vector<640x128xf32>
    %cst_7 = arith.constant dense<0.000000e+00> : vector<8x128xf32>
    %37 = tpu.matmul %35, %36, %cst_7 {dimension_numbers = #tpu.dot_dimension_numbers<[1], [0], [0], [1], [0, 0, 1, 1], [], []>} : vector<8x640xf32>, vector<640x128xf32>, vector<8x128xf32> -> vector<8x128xf32>
    %c0_8 = arith.constant 0 : index
    %c0_9 = arith.constant 0 : index
    %38 = vector.load %arg5[%c0_8, %c0_9] : memref<1x128xf32, #tpu.memory_space<vmem>>, vector<1x128xf32>
    %39 = vector.broadcast %38 : vector<1x128xf32> to vector<8x128xf32>
    %40 = arith.addf %37, %39 : vector<8x128xf32>
    %c0_10 = arith.constant 0 : index
    %c0_11 = arith.constant 0 : index
    %41 = vector.load %arg6[%c0_10, %c0_11] : memref<8x128xf32, #tpu.memory_space<vmem>>, vector<8x128xf32>
    tpu.vector_store %arg6[%c0_10, %c0_11], %40 {strides = array<i32>} : memref<8x128xf32, #tpu.memory_space<vmem>>, vector<8x128xf32>,
    return
  }
  func.func @transform_0(%arg0: i32) -> (i32, i32) {
    %c0_i32 = arith.constant 0 : i32
    %c0_i32_0 = arith.constant 0 : i32
    return %arg0, %c0_i32 : i32, i32
  }
  func.func @transform_1(%arg0: i32) -> (i32, i32) {
    %c0_i32 = arith.constant 0 : i32
    %c0_i32_0 = arith.constant 0 : i32
    %c0_i32_1 = arith.constant 0 : i32
    return %c0_i32, %c0_i32_0 : i32, i32
  }
  func.func @transform_2(%arg0: i32) -> (i32, i32) {
    %c0_i32 = arith.constant 0 : i32
    %c0_i32_0 = arith.constant 0 : i32
    %c0_i32_1 = arith.constant 0 : i32
    return %c0_i32, %c0_i32_0 : i32, i32
  }
  func.func @transform_3(%arg0: i32) -> (i32, i32) {
    %c0_i32 = arith.constant 0 : i32
    %c0_i32_0 = arith.constant 0 : i32
    %c0_i32_1 = arith.constant 0 : i32
    return %c0_i32, %c0_i32_0 : i32, i32
  }
  func.func @transform_4(%arg0: i32) -> (i32, i32) {
    %c0_i32 = arith.constant 0 : i32
    %c0_i32_0 = arith.constant 0 : i32
    %c0_i32_1 = arith.constant 0 : i32
    return %c0_i32, %c0_i32_0 : i32, i32
  }
  func.func @transform_5(%arg0: i32) -> (i32, i32) {
    %c0_i32 = arith.constant 0 : i32
    %c0_i32_0 = arith.constant 0 : i32
    return %arg0, %c0_i32 : i32, i32
  }
}

</mosaic_0001>

<llo_original>
// kernel: sascl_forward.1
$region0: #{sascl_forward.1}
  #allocation0 [shape = 'u32[]', space=smem, size = 0x4, offset = 0x4, fixed_abs, tag = 'smem constant byte address 0x4 - core index']
  #allocation1 [shape = 'u32[144,128]{1,0:T(1,128)}', space=vmem, size = 0x12000, scoped, tag = 'internal scratch']
  %s0 = inlined_call_operand.hbm [shape: f32[8,32], index: 0, kind: input, shape index: {}]
  %s1 = inlined_call_operand.hbm [shape: f32[32,640], index: 1, kind: input, shape index: {}]
  %s2 = inlined_call_operand.hbm [shape: f32[1,640], index: 2, kind: input, shape index: {}]
  %s3 = inlined_call_operand.hbm [shape: f32[640,128], index: 3, kind: input, shape index: {}]
  %s4 = inlined_call_operand.vmem [shape: f32[1,128], index: 4, kind: input, shape index: {}]
  %s5 = inlined_call_operand.hbm [shape: f32[8,128], index: 5, kind: output, shape index: {}]
  %s6 = sld [smem:[#allocation0]]
  $region46: #{sascl_forward.1} parent=0
    _
  %s8 = ssub.s32 1, %s6
  %s9 = scalar_select 0, %s8, %s6
  $region1: #{sascl_forward.1} parent=0
    #allocation2 [shape = 'u8[4096]{0}', space=vmem, size = 0x1000, scoped, tag = 'input window, operand 0, single buffered']
    #allocation3 [shape = 's32[1]{0}', space=sflag, size = 0x4, scoped, tag = 'scoped memory for sascl_forward.1']
    #allocation4 [shape = 's32[1]{0}', space=sflag, size = 0x4, scoped, tag = 'scoped memory for sascl_forward.1']
    #allocation5 [shape = 'u8[81920]{0}', space=vmem, size = 0x14000, scoped, tag = 'input window, operand 1, single buffered']
    #allocation6 [shape = 's32[1]{0}', space=sflag, size = 0x4, scoped, tag = 'scoped memory for sascl_forward.1']
    #allocation7 [shape = 'u8[2560]{0}', space=vmem, size = 0xc00, scoped, tag = 'input window, operand 2, single buffered']
    #allocation8 [shape = 'u8[327680]{0}', space=vmem, size = 0x50000, scoped, tag = 'input window, operand 3, single buffered']
    #allocation9 [shape = 's32[1]{0}', space=sflag, size = 0x4, scoped, tag = 'scoped memory for sascl_forward.1']
    #allocation10 [shape = 'u8[4096]{0}', space=vmem, size = 0x1000, scoped, tag = 'output window, operand 0, single buffered']
    %10 = vsyncpa [#allocation3], 0
    %11 = vsyncpa [#allocation6], 0
    %12 = vsyncpa [#allocation9], 0
    %13 = vsyncpa [#allocation4], 0
    // Predicated region
    $region2: #{sascl_forward.1} parent=1 // pred_check
      _
    $region3: #{sascl_forward.1} parent=1 // pred_check_branch
      %15 = sbr.rel (0) target = $region5
    $region4: #{sascl_forward.1} parent=1 // pred_region
      %s17 = ssub.s32 128, 128
      %18 = vsyncadd [#allocation3], %s17
      %s20 = sshll.u32 [#allocation2], 4
      %s21 = int_to_ptr.vmem [resolvable:$true] %s20
      %23 = dma.hbm_to_vmem [thread:$0]  %s0, 128, %s21, [#allocation3]
    $region5: #{sascl_forward.1} parent=1 // pred_fallthru
      _
    // Predicated region
    $region6: #{sascl_forward.1} parent=1 // pred_check
      _
    $region7: #{sascl_forward.1} parent=1 // pred_check_branch
      %25 = sbr.rel (0) target = $region9
    $region8: #{sascl_forward.1} parent=1 // pred_region
      %s27 = ssub.s32 2560, 2560
      %28 = vsyncadd [#allocation6], %s27
      %s29 = sshll.u32 [#allocation5], 4
      %s30 = int_to_ptr.vmem [resolvable:$true] %s29
      %35 = dma.hbm_to_vmem [thread:$0]  %s1, 2560, %s30, [#allocation6], 640, 640, 40
    $region9: #{sascl_forward.1} parent=1 // pred_fallthru
      _
    // Predicated region
    $region10: #{sascl_forward.1} parent=1 // pred_check
      _
    $region11: #{sascl_forward.1} parent=1 // pred_check_branch
      %37 = sbr.rel (0) target = $region13
    $region12: #{sascl_forward.1} parent=1 // pred_region
      %s39 = ssub.s32 80, 80
      %40 = vsyncadd [#allocation6], %s39
      %s42 = sshll.u32 [#allocation7], 4
      %s43 = int_to_ptr.vmem [resolvable:$true] %s42
      %45 = dma.hbm_to_vmem [thread:$0]  %s2, 80, %s43, [#allocation6]
    $region13: #{sascl_forward.1} parent=1 // pred_fallthru
      _
    // Predicated region
    $region14: #{sascl_forward.1} parent=1 // pred_check
      _
    $region15: #{sascl_forward.1} parent=1 // pred_check_branch
      %47 = sbr.rel (0) target = $region17
    $region16: #{sascl_forward.1} parent=1 // pred_region
      %s49 = ssub.s32 10240, 10240
      %50 = vsyncadd [#allocation9], %s49
      %s51 = sshll.u32 [#allocation8], 4
      %s52 = int_to_ptr.vmem [resolvable:$true] %s51
      %57 = dma.hbm_to_vmem [thread:$0]  %s3, 10240, %s52, [#allocation9], 128, 128, 8
    $region17: #{sascl_forward.1} parent=1 // pred_fallthru
      _
    // Predicated region
    $region18: #{sascl_forward.1} parent=1 // pred_check
      _
    $region19: #{sascl_forward.1} parent=1 // pred_check_branch
      %59 = sbr.rel (0) target = $region21
    $region20: #{sascl_forward.1} parent=1 // pred_region
      _
    $region21: #{sascl_forward.1} parent=1 // pred_fallthru
      _
    // Predicated region
    $region22: #{sascl_forward.1} parent=1 // pred_check
      _
    $region23: #{sascl_forward.1} parent=1 // pred_check_branch
      %61 = sbr.rel (0) target = $region25
    $region24: #{sascl_forward.1} parent=1 // pred_region
      %62 = dma.done [#allocation3], 128
    $region25: #{sascl_forward.1} parent=1 // pred_fallthru
      _
    // Predicated region
    $region26: #{sascl_forward.1} parent=1 // pred_check
      _
    $region27: #{sascl_forward.1} parent=1 // pred_check_branch
      %64 = sbr.rel (0) target = $region29
    $region28: #{sascl_forward.1} parent=1 // pred_region
      %65 = dma.done [#allocation6], 2560
    $region29: #{sascl_forward.1} parent=1 // pred_fallthru
      _
    // Predicated region
    $region30: #{sascl_forward.1} parent=1 // pred_check
      _
    $region31: #{sascl_forward.1} parent=1 // pred_check_branch
      %67 = sbr.rel (0) target = $region33
    $region32: #{sascl_forward.1} parent=1 // pred_region
      %68 = dma.done [#allocation6], 80
    $region33: #{sascl_forward.1} parent=1 // pred_fallthru
      _
    // Predicated region
    $region34: #{sascl_forward.1} parent=1 // pred_check
      _
    $region35: #{sascl_forward.1} parent=1 // pred_check_branch
      %70 = sbr.rel (0) target = $region37
    $region36: #{sascl_forward.1} parent=1 // pred_region
      %71 = dma.done [#allocation9], 10240
    $region37: #{sascl_forward.1} parent=1 // pred_fallthru
      _
    %v72 = vld [vmem:[#allocation2] sm:$0xff]
    %v73 = vld [vmem:[#allocation5] sm:$0xff]
    %v74 = vld [vmem:[#allocation5 + $0x8] sm:$0xff]
    %v75 = vld [vmem:[#allocation5 + $0x10] sm:$0xff]
    %v76 = vld [vmem:[#allocation5 + $0x18] sm:$0xff]
    %v77 = vld [vmem:[#allocation5 + $0x20] sm:$0xff]
    %v78 = vld [vmem:[#allocation5 + $0x28] sm:$0xff]
    %v79 = vld [vmem:[#allocation5 + $0x30] sm:$0xff]
    %v80 = vld [vmem:[#allocation5 + $0x38] sm:$0xff]
    %v81 = vld [vmem:[#allocation5 + $0x40] sm:$0xff]
    %v82 = vld [vmem:[#allocation5 + $0x48] sm:$0xff]
    %v83 = vld [vmem:[#allocation5 + $0x50] sm:$0xff]
    %v84 = vld [vmem:[#allocation5 + $0x58] sm:$0xff]
    %v85 = vld [vmem:[#allocation5 + $0x60] sm:$0xff]
    %v86 = vld [vmem:[#allocation5 + $0x68] sm:$0xff]
    %v87 = vld [vmem:[#allocation5 + $0x70] sm:$0xff]
    %v88 = vld [vmem:[#allocation5 + $0x78] sm:$0xff]
    %v89 = vld [vmem:[#allocation5 + $0x80] sm:$0xff]
    %v90 = vld [vmem:[#allocation5 + $0x88] sm:$0xff]
    %v91 = vld [vmem:[#allocation5 + $0x90] sm:$0xff]
    %v92 = vld [vmem:[#allocation5 + $0x98] sm:$0xff]
    %v93 = vld [vmem:[#allocation7] sm:$0x1f]
    %v95 = vlaneseq
    %v96 = vshrl.u32 %v95, 7
    %v97 = vsub.s32 0, %v96
    %v98 = vrot.slane %v93, %v97
    %v99 = vlaneseq
    %v100 = vshrl.u32 %v99, 7
    %v101 = vsub.s32 1, %v100
    %v102 = vrot.slane %v93, %v101
    %v103 = vlaneseq
    %v104 = vshrl.u32 %v103, 7
    %v105 = vsub.s32 2, %v104
    %v106 = vrot.slane %v93, %v105
    %v107 = vlaneseq
    %v108 = vshrl.u32 %v107, 7
    %v109 = vsub.s32 3, %v108
    %v110 = vrot.slane %v93, %v109
    %v111 = vlaneseq
    %v112 = vshrl.u32 %v111, 7
    %v113 = vsub.s32 4, %v112
    %v114 = vrot.slane %v93, %v113
    %vm120 = vcmask 261120
    %v122 = vsel %vm120, %v72, 0
    %124 = vmatprep.subr.mxu0 0.0
    %125 = vmatpush1.msra.mxu0 0.0
    %126 = vmatprep.subr.mxu0 0.0
    %127 = vmatpush1.msra.mxu0 0.0
    %128 = vmatprep.subr.mxu0 0.0
    %129 = vmatpush1.msra.mxu0 0.0
    %130 = vmatprep.subr.mxu0 0.0
    %131 = vmatpush1.msra.mxu0 0.0
    %132 = vmatprep.subr.mxu0 0.0
    %133 = vmatpush1.msra.mxu0 0.0
    %134 = vmatprep.subr.mxu0 0.0
    %135 = vmatpush1.msra.mxu0 0.0
    %136 = vmatprep.subr.mxu0 0.0
    %137 = vmatpush1.msra.mxu0 0.0
    %138 = vmatprep.subr.mxu0 0.0
    %139 = vmatpush1.msra.mxu0 0.0
    %140 = vmatprep.subr.mxu0 0.0
    %141 = vmatpush1.msra.mxu0 0.0
    %142 = vmatprep.subr.mxu0 0.0
    %143 = vmatpush1.msra.mxu0 0.0
    %144 = vmatprep.subr.mxu0 0.0
    %145 = vmatpush1.msra.mxu0 0.0
    %146 = vmatprep.subr.mxu0 0.0
    %147 = vmatpush1.msra.mxu0 0.0
    %148 = vmatprep.subr.mxu0 %v89
    %149 = vmatpush1.msra.mxu0 %v88
    %150 = vmatprep.subr.mxu0 %v84
    %151 = vmatpush1.msra.mxu0 %v83
    %152 = vmatprep.subr.mxu0 %v79
    %153 = vmatpush1.msra.mxu0 %v78
    %154 = vmatprep.subr.mxu0 %v74
    %155 = vmatpush1.msra.mxu0 %v73
    %156 = vmatprep.subr.mxu0 0.0
    %157 = vmatpush2.msra.mxu0 0.0
    %158 = vmatprep.subr.mxu0 0.0
    %159 = vmatpush2.msra.mxu0 0.0
    %160 = vmatprep.subr.mxu0 0.0
    %161 = vmatpush2.msra.mxu0 0.0
    %162 = vmatprep.subr.mxu0 0.0
    %163 = vmatpush2.msra.mxu0 0.0
    %164 = vmatprep.subr.mxu0 0.0
    %165 = vmatpush2.msra.mxu0 0.0
    %166 = vmatprep.subr.mxu0 0.0
    %167 = vmatpush2.msra.mxu0 0.0
    %168 = vmatprep.subr.mxu0 0.0
    %169 = vmatpush2.msra.mxu0 0.0
    %170 = vmatprep.subr.mxu0 0.0
    %171 = vmatpush2.msra.mxu0 0.0
    %172 = vmatprep.subr.mxu0 0.0
    %173 = vmatpush2.msra.mxu0 0.0
    %174 = vmatprep.subr.mxu0 0.0
    %175 = vmatpush2.msra.mxu0 0.0
    %176 = vmatprep.subr.mxu0 0.0
    %177 = vmatpush2.msra.mxu0 0.0
    %178 = vmatprep.subr.mxu0 0.0
    %179 = vmatpush2.msra.mxu0 0.0
    %180 = vmatprep.subr.mxu0 0.0
    %181 = vmatpush2.msra.mxu0 0.0
    %182 = vmatprep.subr.mxu0 0.0
    %183 = vmatpush2.msra.mxu0 0.0
    %184 = vmatprep.subr.mxu0 0.0
    %185 = vmatpush2.msra.mxu0 0.0
    %186 = vmatprep.subr.mxu0 0.0
    %187 = vmatpush2.msra.mxu0 0.0
    %188 = vmatprep.mubr.f32.mxu0 0.0
    %189 = vmatmul.mubr.f32.gmra.mxu0 %v122
    %v190 = vpop.f32.mrf.mxu0
    %v191 = vadd.f32 %v98, %v190
    %v192 = vpop.f32.mrf.mxu0
    %v193 = vadd.f32 %v102, %v192
    %194 = vdwg.mxu0
    %195 = vmatprep.subr.mxu0 0.0
    %196 = vmatpush1.msra.mxu0 0.0
    %197 = vmatprep.subr.mxu0 0.0
    %198 = vmatpush1.msra.mxu0 0.0
    %199 = vmatprep.subr.mxu0 0.0
    %200 = vmatpush1.msra.mxu0 0.0
    %201 = vmatprep.subr.mxu0 0.0
    %202 = vmatpush1.msra.mxu0 0.0
    %203 = vmatprep.subr.mxu0 0.0
    %204 = vmatpush1.msra.mxu0 0.0
    %205 = vmatprep.subr.mxu0 0.0
    %206 = vmatpush1.msra.mxu0 0.0
    %207 = vmatprep.subr.mxu0 0.0
    %208 = vmatpush1.msra.mxu0 0.0
    %209 = vmatprep.subr.mxu0 0.0
    %210 = vmatpush1.msra.mxu0 0.0
    %211 = vmatprep.subr.mxu0 0.0
    %212 = vmatpush1.msra.mxu0 0.0
    %213 = vmatprep.subr.mxu0 0.0
    %214 = vmatpush1.msra.mxu0 0.0
    %215 = vmatprep.subr.mxu0 0.0
    %216 = vmatpush1.msra.mxu0 0.0
    %217 = vmatprep.subr.mxu0 0.0
    %218 = vmatpush1.msra.mxu0 0.0
    %219 = vmatprep.subr.mxu0 %v91
    %220 = vmatpush1.msra.mxu0 %v90
    %221 = vmatprep.subr.mxu0 %v86
    %222 = vmatpush1.msra.mxu0 %v85
    %223 = vmatprep.subr.mxu0 %v81
    %224 = vmatpush1.msra.mxu0 %v80
    %225 = vmatprep.subr.mxu0 %v76
    %226 = vmatpush1.msra.mxu0 %v75
    %227 = vmatprep.subr.mxu0 0.0
    %228 = vmatpush2.msra.mxu0 0.0
    %229 = vmatprep.subr.mxu0 0.0
    %230 = vmatpush2.msra.mxu0 0.0
    %231 = vmatprep.subr.mxu0 0.0
    %232 = vmatpush2.msra.mxu0 0.0
    %233 = vmatprep.subr.mxu0 0.0
    %234 = vmatpush2.msra.mxu0 0.0
    %235 = vmatprep.subr.mxu0 0.0
    %236 = vmatpush2.msra.mxu0 0.0
    %237 = vmatprep.subr.mxu0 0.0
    %238 = vmatpush2.msra.mxu0 0.0
    %239 = vmatprep.subr.mxu0 0.0
    %240 = vmatpush2.msra.mxu0 0.0
    %241 = vmatprep.subr.mxu0 0.0
    %242 = vmatpush2.msra.mxu0 0.0
    %243 = vmatprep.subr.mxu0 0.0
    %244 = vmatpush2.msra.mxu0 0.0
    %245 = vmatprep.subr.mxu0 0.0
    %246 = vmatpush2.msra.mxu0 0.0
    %247 = vmatprep.subr.mxu0 0.0
    %248 = vmatpush2.msra.mxu0 0.0
    %249 = vmatprep.subr.mxu0 0.0
    %250 = vmatpush2.msra.mxu0 0.0
    %251 = vmatprep.subr.mxu0 0.0
    %252 = vmatpush2.msra.mxu0 0.0
    %253 = vmatprep.subr.mxu0 0.0
    %254 = vmatpush2.msra.mxu0 0.0
    %255 = vmatprep.subr.mxu0 0.0
    %256 = vmatpush2.msra.mxu0 0.0
    %257 = vmatprep.subr.mxu0 0.0
    %258 = vmatpush2.msra.mxu0 0.0
    %259 = vmatprep.mubr.f32.mxu0 0.0
    %260 = vmatmul.mubr.f32.gmra.mxu0 %v122
    %v261 = vpop.f32.mrf.mxu0
    %v262 = vadd.f32 %v106, %v261
    %v263 = vpop.f32.mrf.mxu0
    %v264 = vadd.f32 %v110, %v263
    %265 = vdwg.mxu0
    %266 = vmatprep.subr.mxu0 0.0
    %267 = vmatpush1.msra.mxu0 0.0
    %268 = vmatprep.subr.mxu0 0.0
    %269 = vmatpush1.msra.mxu0 0.0
    %270 = vmatprep.subr.mxu0 0.0
    %271 = vmatpush1.msra.mxu0 0.0
    %272 = vmatprep.subr.mxu0 0.0
    %273 = vmatpush1.msra.mxu0 0.0
    %274 = vmatprep.subr.mxu0 0.0
    %275 = vmatpush1.msra.mxu0 0.0
    %276 = vmatprep.subr.mxu0 0.0
    %277 = vmatpush1.msra.mxu0 0.0
    %278 = vmatprep.subr.mxu0 0.0
    %279 = vmatpush1.msra.mxu0 0.0
    %280 = vmatprep.subr.mxu0 0.0
    %281 = vmatpush1.msra.mxu0 0.0
    %282 = vmatprep.subr.mxu0 0.0
    %283 = vmatpush1.msra.mxu0 0.0
    %284 = vmatprep.subr.mxu0 0.0
    %285 = vmatpush1.msra.mxu0 0.0
    %286 = vmatprep.subr.mxu0 0.0
    %287 = vmatpush1.msra.mxu0 0.0
    %288 = vmatprep.subr.mxu0 0.0
    %289 = vmatpush1.msra.mxu0 0.0
    %290 = vmatprep.subr.mxu0 0.0
    %291 = vmatpush1.msra.mxu0 %v92
    %292 = vmatprep.subr.mxu0 0.0
    %293 = vmatpush1.msra.mxu0 %v87
    %294 = vmatprep.subr.mxu0 0.0
    %295 = vmatpush1.msra.mxu0 %v82
    %296 = vmatprep.subr.mxu0 0.0
    %297 = vmatpush1.msra.mxu0 %v77
    %298 = vmatprep.subr.mxu0 0.0
    %299 = vmatpush2.msra.mxu0 0.0
    %300 = vmatprep.subr.mxu0 0.0
    %301 = vmatpush2.msra.mxu0 0.0
    %302 = vmatprep.subr.mxu0 0.0
    %303 = vmatpush2.msra.mxu0 0.0
    %304 = vmatprep.subr.mxu0 0.0
    %305 = vmatpush2.msra.mxu0 0.0
    %306 = vmatprep.subr.mxu0 0.0
    %307 = vmatpush2.msra.mxu0 0.0
    %308 = vmatprep.subr.mxu0 0.0
    %309 = vmatpush2.msra.mxu0 0.0
    %310 = vmatprep.subr.mxu0 0.0
    %311 = vmatpush2.msra.mxu0 0.0
    %312 = vmatprep.subr.mxu0 0.0
    %313 = vmatpush2.msra.mxu0 0.0
    %314 = vmatprep.subr.mxu0 0.0
    %315 = vmatpush2.msra.mxu0 0.0
    %316 = vmatprep.subr.mxu0 0.0
    %317 = vmatpush2.msra.mxu0 0.0
    %318 = vmatprep.subr.mxu0 0.0
    %319 = vmatpush2.msra.mxu0 0.0
    %320 = vmatprep.subr.mxu0 0.0
    %321 = vmatpush2.msra.mxu0 0.0
    %322 = vmatprep.subr.mxu0 0.0
    %323 = vmatpush2.msra.mxu0 0.0
    %324 = vmatprep.subr.mxu0 0.0
    %325 = vmatpush2.msra.mxu0 0.0
    %326 = vmatprep.subr.mxu0 0.0
    %327 = vmatpush2.msra.mxu0 0.0
    %328 = vmatprep.subr.mxu0 0.0
    %329 = vmatpush2.msra.mxu0 0.0
    %330 = vmatprep.mubr.f32.mxu0 0.0
    %331 = vmatmul.mubr.f32.gmra.mxu0 %v122
    %v332 = vpop.f32.mrf.mxu0
    %v333 = vadd.f32 %v114, %v332
    %v334 = vpop.f32.mrf.mxu0
    %335 = vdwg.mxu0
    %v336 = vmax.f32 %v191, %v193
    %v337 = vmax.f32 %v336, %v262
    %v338 = vmax.f32 %v337, %v264
    %v339 = vmax.f32 %v338, %v333
    %v340 = vsub.f32 %v191, %v339
    %v341 = vmul.f32 %v340, 1.442695
    %v342 = vpow.pop %v341
    %v343 = vsub.f32 %v193, %v339
    %v344 = vmul.f32 %v343, 1.442695
    %v345 = vpow.pop %v344
    %v346 = vsub.f32 %v262, %v339
    %v347 = vmul.f32 %v346, 1.442695
    %v348 = vpow.pop %v347
    %v349 = vsub.f32 %v264, %v339
    %v350 = vmul.f32 %v349, 1.442695
    %v351 = vpow.pop %v350
    %v352 = vsub.f32 %v333, %v339
    %v353 = vmul.f32 %v352, 1.442695
    %v354 = vpow.pop %v353
    %v355 = vadd.f32 %v342, %v345
    %v356 = vadd.f32 %v355, %v348
    %v357 = vadd.f32 %v356, %v351
    %v358 = vadd.f32 %v357, %v354
    %v359 = vrcp.pop %v358
    %v360 = vmul.f32 %v342, %v359
    %v361 = vmul.f32 %v345, %v359
    %v362 = vmul.f32 %v348, %v359
    %v363 = vmul.f32 %v351, %v359
    %v364 = vmul.f32 %v354, %v359
    %v365 = vld [vmem:[#allocation8] sm:$0xff]
    %v366 = vld [vmem:[#allocation8 + $0x8] sm:$0xff]
    %v367 = vld [vmem:[#allocation8 + $0x10] sm:$0xff]
    %v368 = vld [vmem:[#allocation8 + $0x18] sm:$0xff]
    %v369 = vld [vmem:[#allocation8 + $0x20] sm:$0xff]
    %v370 = vld [vmem:[#allocation8 + $0x28] sm:$0xff]
    %v371 = vld [vmem:[#allocation8 + $0x30] sm:$0xff]
    %v372 = vld [vmem:[#allocation8 + $0x38] sm:$0xff]
    %v373 = vld [vmem:[#allocation8 + $0x40] sm:$0xff]
    %v374 = vld [vmem:[#allocation8 + $0x48] sm:$0xff]
    %v375 = vld [vmem:[#allocation8 + $0x50] sm:$0xff]
    %v376 = vld [vmem:[#allocation8 + $0x58] sm:$0xff]
    %v377 = vld [vmem:[#allocation8 + $0x60] sm:$0xff]
    %v378 = vld [vmem:[#allocation8 + $0x68] sm:$0xff]
    %v379 = vld [vmem:[#allocation8 + $0x70] sm:$0xff]
    %v380 = vld [vmem:[#allocation8 + $0x78] sm:$0xff]
    %v381 = vld [vmem:[#allocation8 + $0x80] sm:$0xff]
    %v382 = vld [vmem:[#allocation8 + $0x88] sm:$0xff]
    %v383 = vld [vmem:[#allocation8 + $0x90] sm:$0xff]
    %v384 = vld [vmem:[#allocation8 + $0x98] sm:$0xff]
    %v385 = vld [vmem:[#allocation8 + $0xa0] sm:$0xff]
    %v386 = vld [vmem:[#allocation8 + $0xa8] sm:$0xff]
    %v387 = vld [vmem:[#allocation8 + $0xb0] sm:$0xff]
    %v388 = vld [vmem:[#allocation8 + $0xb8] sm:$0xff]
    %v389 = vld [vmem:[#allocation8 + $0xc0] sm:$0xff]
    %v390 = vld [vmem:[#allocation8 + $0xc8] sm:$0xff]
    %v391 = vld [vmem:[#allocation8 + $0xd0] sm:$0xff]
    %v392 = vld [vmem:[#allocation8 + $0xd8] sm:$0xff]
    %v393 = vld [vmem:[#allocation8 + $0xe0] sm:$0xff]
    %v394 = vld [vmem:[#allocation8 + $0xe8] sm:$0xff]
    %v395 = vld [vmem:[#allocation8 + $0xf0] sm:$0xff]
    %v396 = vld [vmem:[#allocation8 + $0xf8] sm:$0xff]
    %v397 = vld [vmem:[#allocation8 + $0x100] sm:$0xff]
    %v398 = vld [vmem:[#allocation8 + $0x108] sm:$0xff]
    %v399 = vld [vmem:[#allocation8 + $0x110] sm:$0xff]
    %v400 = vld [vmem:[#allocation8 + $0x118] sm:$0xff]
    %v401 = vld [vmem:[#allocation8 + $0x120] sm:$0xff]
    %v402 = vld [vmem:[#allocation8 + $0x128] sm:$0xff]
    %v403 = vld [vmem:[#allocation8 + $0x130] sm:$0xff]
    %v404 = vld [vmem:[#allocation8 + $0x138] sm:$0xff]
    %v405 = vld [vmem:[#allocation8 + $0x140] sm:$0xff]
    %v406 = vld [vmem:[#allocation8 + $0x148] sm:$0xff]
    %v407 = vld [vmem:[#allocation8 + $0x150] sm:$0xff]
    %v408 = vld [vmem:[#allocation8 + $0x158] sm:$0xff]
    %v409 = vld [vmem:[#allocation8 + $0x160] sm:$0xff]
    %v410 = vld [vmem:[#allocation8 + $0x168] sm:$0xff]
    %v411 = vld [vmem:[#allocation8 + $0x170] sm:$0xff]
    %v412 = vld [vmem:[#allocation8 + $0x178] sm:$0xff]
    %v413 = vld [vmem:[#allocation8 + $0x180] sm:$0xff]
    %v414 = vld [vmem:[#allocation8 + $0x188] sm:$0xff]
    %v415 = vld [vmem:[#allocation8 + $0x190] sm:$0xff]
    %v416 = vld [vmem:[#allocation8 + $0x198] sm:$0xff]
    %v417 = vld [vmem:[#allocation8 + $0x1a0] sm:$0xff]
    %v418 = vld [vmem:[#allocation8 + $0x1a8] sm:$0xff]
    %v419 = vld [vmem:[#allocation8 + $0x1b0] sm:$0xff]
    %v420 = vld [vmem:[#allocation8 + $0x1b8] sm:$0xff]
    %v421 = vld [vmem:[#allocation8 + $0x1c0] sm:$0xff]
    %v422 = vld [vmem:[#allocation8 + $0x1c8] sm:$0xff]
    %v423 = vld [vmem:[#allocation8 + $0x1d0] sm:$0xff]
    %v424 = vld [vmem:[#allocation8 + $0x1d8] sm:$0xff]
    %v425 = vld [vmem:[#allocation8 + $0x1e0] sm:$0xff]
    %v426 = vld [vmem:[#allocation8 + $0x1e8] sm:$0xff]
    %v427 = vld [vmem:[#allocation8 + $0x1f0] sm:$0xff]
    %v428 = vld [vmem:[#allocation8 + $0x1f8] sm:$0xff]
    %v429 = vld [vmem:[#allocation8 + $0x200] sm:$0xff]
    %v430 = vld [vmem:[#allocation8 + $0x208] sm:$0xff]
    %v431 = vld [vmem:[#allocation8 + $0x210] sm:$0xff]
    %v432 = vld [vmem:[#allocation8 + $0x218] sm:$0xff]
    %v433 = vld [vmem:[#allocation8 + $0x220] sm:$0xff]
    %v434 = vld [vmem:[#allocation8 + $0x228] sm:$0xff]
    %v435 = vld [vmem:[#allocation8 + $0x230] sm:$0xff]
    %v436 = vld [vmem:[#allocation8 + $0x238] sm:$0xff]
    %v437 = vld [vmem:[#allocation8 + $0x240] sm:$0xff]
    %v438 = vld [vmem:[#allocation8 + $0x248] sm:$0xff]
    %v439 = vld [vmem:[#allocation8 + $0x250] sm:$0xff]
    %v440 = vld [vmem:[#allocation8 + $0x258] sm:$0xff]
    %v441 = vld [vmem:[#allocation8 + $0x260] sm:$0xff]
    %v442 = vld [vmem:[#allocation8 + $0x268] sm:$0xff]
    %v443 = vld [vmem:[#allocation8 + $0x270] sm:$0xff]
    %v444 = vld [vmem:[#allocation8 + $0x278] sm:$0xff]
    %v445 = vld [vmem:[%s4] sm:$0x1]
    %v447 = vlaneseq
    %v448 = vshrl.u32 %v447, 7
    %v449 = vsub.s32 0, %v448
    %v450 = vrot.slane %v445, %v449
    %452 = vmatprep.subr.mxu0 0.0
    %453 = vmatpush1.msra.mxu0 %v380
    %454 = vmatprep.subr.mxu0 0.0
    %455 = vmatpush1.msra.mxu0 %v379
    %456 = vmatprep.subr.mxu0 0.0
    %457 = vmatpush1.msra.mxu0 %v378
    %458 = vmatprep.subr.mxu0 0.0
    %459 = vmatpush1.msra.mxu0 %v377
    %460 = vmatprep.subr.mxu0 0.0
    %461 = vmatpush1.msra.mxu0 %v376
    %462 = vmatprep.subr.mxu0 0.0
    %463 = vmatpush1.msra.mxu0 %v375
    %464 = vmatprep.subr.mxu0 0.0
    %465 = vmatpush1.msra.mxu0 %v374
    %466 = vmatprep.subr.mxu0 0.0
    %467 = vmatpush1.msra.mxu0 %v373
    %468 = vmatprep.subr.mxu0 0.0
    %469 = vmatpush1.msra.mxu0 %v372
    %470 = vmatprep.subr.mxu0 0.0
    %471 = vmatpush1.msra.mxu0 %v371
    %472 = vmatprep.subr.mxu0 0.0
    %473 = vmatpush1.msra.mxu0 %v370
    %474 = vmatprep.subr.mxu0 0.0
    %475 = vmatpush1.msra.mxu0 %v369
    %476 = vmatprep.subr.mxu0 0.0
    %477 = vmatpush1.msra.mxu0 %v368
    %478 = vmatprep.subr.mxu0 0.0
    %479 = vmatpush1.msra.mxu0 %v367
    %480 = vmatprep.subr.mxu0 0.0
    %481 = vmatpush1.msra.mxu0 %v366
    %482 = vmatprep.subr.mxu0 0.0
    %483 = vmatpush1.msra.mxu0 %v365
    %484 = vmatprep.subr.mxu0 0.0
    %485 = vmatpush2.msra.mxu0 %v396
    %486 = vmatprep.subr.mxu0 0.0
    %487 = vmatpush2.msra.mxu0 %v395
    %488 = vmatprep.subr.mxu0 0.0
    %489 = vmatpush2.msra.mxu0 %v394
    %490 = vmatprep.subr.mxu0 0.0
    %491 = vmatpush2.msra.mxu0 %v393
    %492 = vmatprep.subr.mxu0 0.0
    %493 = vmatpush2.msra.mxu0 %v392
    %494 = vmatprep.subr.mxu0 0.0
    %495 = vmatpush2.msra.mxu0 %v391
    %496 = vmatprep.subr.mxu0 0.0
    %497 = vmatpush2.msra.mxu0 %v390
    %498 = vmatprep.subr.mxu0 0.0
    %499 = vmatpush2.msra.mxu0 %v389
    %500 = vmatprep.subr.mxu0 0.0
    %501 = vmatpush2.msra.mxu0 %v388
    %502 = vmatprep.subr.mxu0 0.0
    %503 = vmatpush2.msra.mxu0 %v387
    %504 = vmatprep.subr.mxu0 0.0
    %505 = vmatpush2.msra.mxu0 %v386
    %506 = vmatprep.subr.mxu0 0.0
    %507 = vmatpush2.msra.mxu0 %v385
    %508 = vmatprep.subr.mxu0 0.0
    %509 = vmatpush2.msra.mxu0 %v384
    %510 = vmatprep.subr.mxu0 0.0
    %511 = vmatpush2.msra.mxu0 %v383
    %512 = vmatprep.subr.mxu0 0.0
    %513 = vmatpush2.msra.mxu0 %v382
    %514 = vmatprep.subr.mxu0 0.0
    %515 = vmatpush2.msra.mxu0 %v381
    %516 = vmatprep.mubr.f32.mxu0 %v361
    %517 = vmatmul.mubr.f32.gmra.mxu0 %v360
    %v518 = vpop.f32.mrf.mxu0
    %v519 = vadd.f32 %v450, %v518
    %v520 = vpop.f32.mrf.mxu0
    %521 = vdwg.mxu0
    %522 = vmatprep.subr.mxu0 0.0
    %523 = vmatpush1.msra.mxu0 %v412
    %524 = vmatprep.subr.mxu0 0.0
    %525 = vmatpush1.msra.mxu0 %v411
    %526 = vmatprep.subr.mxu0 0.0
    %527 = vmatpush1.msra.mxu0 %v410
    %528 = vmatprep.subr.mxu0 0.0
    %529 = vmatpush1.msra.mxu0 %v409
    %530 = vmatprep.subr.mxu0 0.0
    %531 = vmatpush1.msra.mxu0 %v408
    %532 = vmatprep.subr.mxu0 0.0
    %533 = vmatpush1.msra.mxu0 %v407
    %534 = vmatprep.subr.mxu0 0.0
    %535 = vmatpush1.msra.mxu0 %v406
    %536 = vmatprep.subr.mxu0 0.0
    %537 = vmatpush1.msra.mxu0 %v405
    %538 = vmatprep.subr.mxu0 0.0
    %539 = vmatpush1.msra.mxu0 %v404
    %540 = vmatprep.subr.mxu0 0.0
    %541 = vmatpush1.msra.mxu0 %v403
    %542 = vmatprep.subr.mxu0 0.0
    %543 = vmatpush1.msra.mxu0 %v402
    %544 = vmatprep.subr.mxu0 0.0
    %545 = vmatpush1.msra.mxu0 %v401
    %546 = vmatprep.subr.mxu0 0.0
    %547 = vmatpush1.msra.mxu0 %v400
    %548 = vmatprep.subr.mxu0 0.0
    %549 = vmatpush1.msra.mxu0 %v399
    %550 = vmatprep.subr.mxu0 0.0
    %551 = vmatpush1.msra.mxu0 %v398
    %552 = vmatprep.subr.mxu0 0.0
    %553 = vmatpush1.msra.mxu0 %v397
    %554 = vmatprep.subr.mxu0 0.0
    %555 = vmatpush2.msra.mxu0 %v428
    %556 = vmatprep.subr.mxu0 0.0
    %557 = vmatpush2.msra.mxu0 %v427
    %558 = vmatprep.subr.mxu0 0.0
    %559 = vmatpush2.msra.mxu0 %v426
    %560 = vmatprep.subr.mxu0 0.0
    %561 = vmatpush2.msra.mxu0 %v425
    %562 = vmatprep.subr.mxu0 0.0
    %563 = vmatpush2.msra.mxu0 %v424
    %564 = vmatprep.subr.mxu0 0.0
    %565 = vmatpush2.msra.mxu0 %v423
    %566 = vmatprep.subr.mxu0 0.0
    %567 = vmatpush2.msra.mxu0 %v422
    %568 = vmatprep.subr.mxu0 0.0
    %569 = vmatpush2.msra.mxu0 %v421
    %570 = vmatprep.subr.mxu0 0.0
    %571 = vmatpush2.msra.mxu0 %v420
    %572 = vmatprep.subr.mxu0 0.0
    %573 = vmatpush2.msra.mxu0 %v419
    %574 = vmatprep.subr.mxu0 0.0
    %575 = vmatpush2.msra.mxu0 %v418
    %576 = vmatprep.subr.mxu0 0.0
    %577 = vmatpush2.msra.mxu0 %v417
    %578 = vmatprep.subr.mxu0 0.0
    %579 = vmatpush2.msra.mxu0 %v416
    %580 = vmatprep.subr.mxu0 0.0
    %581 = vmatpush2.msra.mxu0 %v415
    %582 = vmatprep.subr.mxu0 0.0
    %583 = vmatpush2.msra.mxu0 %v414
    %584 = vmatprep.subr.mxu0 0.0
    %585 = vmatpush2.msra.mxu0 %v413
    %586 = vmatprep.mubr.f32.mxu0 %v363
    %587 = vmatmul.mubr.f32.gmra.mxu0 %v362
    %v588 = vpop.f32.mrf.mxu0
    %v589 = vadd.f32 %v519, %v588
    %v590 = vpop.f32.mrf.mxu0
    %591 = vdwg.mxu0
    %592 = vmatprep.subr.mxu0 0.0
    %593 = vmatpush1.msra.mxu0 %v444
    %594 = vmatprep.subr.mxu0 0.0
    %595 = vmatpush1.msra.mxu0 %v443
    %596 = vmatprep.subr.mxu0 0.0
    %597 = vmatpush1.msra.mxu0 %v442
    %598 = vmatprep.subr.mxu0 0.0
    %599 = vmatpush1.msra.mxu0 %v441
    %600 = vmatprep.subr.mxu0 0.0
    %601 = vmatpush1.msra.mxu0 %v440
    %602 = vmatprep.subr.mxu0 0.0
    %603 = vmatpush1.msra.mxu0 %v439
    %604 = vmatprep.subr.mxu0 0.0
    %605 = vmatpush1.msra.mxu0 %v438
    %606 = vmatprep.subr.mxu0 0.0
    %607 = vmatpush1.msra.mxu0 %v437
    %608 = vmatprep.subr.mxu0 0.0
    %609 = vmatpush1.msra.mxu0 %v436
    %610 = vmatprep.subr.mxu0 0.0
    %611 = vmatpush1.msra.mxu0 %v435
    %612 = vmatprep.subr.mxu0 0.0
    %613 = vmatpush1.msra.mxu0 %v434
    %614 = vmatprep.subr.mxu0 0.0
    %615 = vmatpush1.msra.mxu0 %v433
    %616 = vmatprep.subr.mxu0 0.0
    %617 = vmatpush1.msra.mxu0 %v432
    %618 = vmatprep.subr.mxu0 0.0
    %619 = vmatpush1.msra.mxu0 %v431
    %620 = vmatprep.subr.mxu0 0.0
    %621 = vmatpush1.msra.mxu0 %v430
    %622 = vmatprep.subr.mxu0 0.0
    %623 = vmatpush1.msra.mxu0 %v429
    %624 = vmatprep.subr.mxu0 0.0
    %625 = vmatpush2.msra.mxu0 0.0
    %626 = vmatprep.subr.mxu0 0.0
    %627 = vmatpush2.msra.mxu0 0.0
    %628 = vmatprep.subr.mxu0 0.0
    %629 = vmatpush2.msra.mxu0 0.0
    %630 = vmatprep.subr.mxu0 0.0
    %631 = vmatpush2.msra.mxu0 0.0
    %632 = vmatprep.subr.mxu0 0.0
    %633 = vmatpush2.msra.mxu0 0.0
    %634 = vmatprep.subr.mxu0 0.0
    %635 = vmatpush2.msra.mxu0 0.0
    %636 = vmatprep.subr.mxu0 0.0
    %637 = vmatpush2.msra.mxu0 0.0
    %638 = vmatprep.subr.mxu0 0.0
    %639 = vmatpush2.msra.mxu0 0.0
    %640 = vmatprep.subr.mxu0 0.0
    %641 = vmatpush2.msra.mxu0 0.0
    %642 = vmatprep.subr.mxu0 0.0
    %643 = vmatpush2.msra.mxu0 0.0
    %644 = vmatprep.subr.mxu0 0.0
    %645 = vmatpush2.msra.mxu0 0.0
    %646 = vmatprep.subr.mxu0 0.0
    %647 = vmatpush2.msra.mxu0 0.0
    %648 = vmatprep.subr.mxu0 0.0
    %649 = vmatpush2.msra.mxu0 0.0
    %650 = vmatprep.subr.mxu0 0.0
    %651 = vmatpush2.msra.mxu0 0.0
    %652 = vmatprep.subr.mxu0 0.0
    %653 = vmatpush2.msra.mxu0 0.0
    %654 = vmatprep.subr.mxu0 0.0
    %655 = vmatpush2.msra.mxu0 0.0
    %656 = vmatprep.mubr.f32.mxu0 0.0
    %657 = vmatmul.mubr.f32.gmra.mxu0 %v364
    %v658 = vpop.f32.mrf.mxu0
    %v659 = vadd.f32 %v589, %v658
    %v660 = vpop.f32.mrf.mxu0
    %661 = vdwg.mxu0
    %662 = vst [vmem:[#allocation10] sm:$0xff] %v659
    // Predicated region
    $region38: #{sascl_forward.1} parent=1 // pred_check
      _
    $region39: #{sascl_forward.1} parent=1 // pred_check_branch
      %664 = sbr.rel (0) target = $region41
    $region40: #{sascl_forward.1} parent=1 // pred_region
      %s666 = ssub.s32 128, 128
      %667 = vsyncadd [#allocation4], %s666
      %s669 = sshll.u32 [#allocation10], 4
      %s670 = int_to_ptr.vmem [resolvable:$true] %s669
      %672 = dma.vmem_to_hbm [thread:$0]  %s670, 128, %s5, [#allocation4]
    $region41: #{sascl_forward.1} parent=1 // pred_fallthru
      _
    // Predicated region
    $region42: #{sascl_forward.1} parent=1 // pred_check
      _
    $region43: #{sascl_forward.1} parent=1 // pred_check_branch
      %674 = sbr.rel (0) target = $region45
    $region44: #{sascl_forward.1} parent=1 // pred_region
      %675 = dma.done [#allocation4], 128
    $region45: #{sascl_forward.1} parent=1 // pred_fallthru
      _
    %676 = vsyncpa [#allocation3], 1
    %677 = vsyncpa [#allocation6], 1
    %678 = vsyncpa [#allocation9], 1
    %679 = vsyncpa [#allocation4], 1

</llo_original>
